<compile_context>
chip_gen: v5e
topology: v5e:2x2
jax: 0.10.0
libtpu: 0.0.40
codegen_flags: <defaults>
</compile_context>

<pallas_src>
import jax
import jax.numpy as jnp
from jax.experimental import pallas as pl
from jax.experimental.pallas import tpu as pltpu


def mlp_kernel(x_ref, w1_ref, b1_ref, w2_ref, b2_ref, w3_ref, b3_ref, o_ref):
    # Hoist grid-invariant loads once (JAX does not CSE broadcast_in_dim).
    b1 = b1_ref[...]                 # (1, H1) f32
    b2 = b2_ref[...]                 # (1, H2) f32
    w3_row = w3_ref[...]             # (1, H2) bf16 -- fc3 weights as a row vector
    b3 = b3_ref[...]                 # (1, 1)  f32

    # x streams from HBM as f32; cast to the MXU input dtype HERE (not in the
    # wrapper) so x's HBM traffic is paid exactly once.
    x = x_ref[...].astype(w1_ref.dtype)          # (tile_b, F) bf16

    # fc1 / fc2: bf16 MXU matmuls with f32 accumulation; bias + ReLU on the VPU.
    h1 = jnp.dot(x, w1_ref[...], preferred_element_type=jnp.float32)
    h1 = jnp.maximum(h1 + b1, 0.0)
    h2 = jnp.dot(h1.astype(w2_ref.dtype), w2_ref[...],
                 preferred_element_type=jnp.float32)
    h2 = jnp.maximum(h2 + b2, 0.0)

    # fc3 (H2 -> 1), emitted lane-dense: out[0, b] = sum_h w3[h] * h2[b, h] + b3.
    # Contracting h2 over its minor dim (the q @ k.T pattern) makes the MXU
    # yield the result directly as a (1, tile_b) row.
    out_row = jax.lax.dot_general(
        w3_row, h2.astype(w3_row.dtype),
        dimension_numbers=(((1,), (1,)), ((), ())),
        preferred_element_type=jnp.float32)      # (1, tile_b)
    o_ref[...] = (out_row + b3).astype(o_ref.dtype)


def _round_up(x, m):
    return ((x + m - 1) // m) * m


def _tensorcores_per_chip():
    """Best-effort TensorCore count per chip (v7x has 2; v5e/v6e have 1)."""
    try:
        kind = jax.devices()[0].device_kind.lower()
    except Exception:
        return 1
    return 2 if ("v7" in kind or "tpu7" in kind) else 1


def _select_tile_b(B, num_tc):
    """Per-generation batch-tile selection.

    1-TC chips (v5e/v6e): a single large step (per-step overhead dominates,
    splitting buys nothing).  v7x (2 TCs): an even, >= 2*TC number of
    "parallel" steps with a VMEM-aware 2048-row cap (64 MiB physical VMEM).
    Multi-step tiles are multiples of 256 rows -> full-height MXU passes.
    """
    if B <= 512:
        return B
    max_tile = 2048 if num_tc > 1 else 4096
    min_steps = 2 * num_tc if num_tc > 1 else 1
    steps = max(min_steps, pl.cdiv(B, max_tile))
    if num_tc > 1:
        steps = _round_up(steps, num_tc)
    tile = min(_round_up(pl.cdiv(B, steps), 256), max_tile)
    return B if tile >= B else tile


def net_forward(x, params, *, tile_b=None, compute_dtype=jnp.bfloat16):
    """Forward pass of Net: relu(fc1) -> relu(fc2) -> fc3, fused in one kernel."""
    w1, b1, w2, b2, w3, b3 = params
    B, F = x.shape
    H1 = w1.shape[1]
    H2 = w2.shape[1]
    O = w3.shape[1]                                     # == 1 for this Net

    # Weights are ~7 KB total: casting them here is negligible.  x is NOT
    # pre-cast (cast happens inside the kernel).
    w1_c = w1.astype(compute_dtype)
    w2_c = w2.astype(compute_dtype)
    w3_row = jnp.transpose(w3).astype(compute_dtype)    # (1, H2)
    b1_f = b1.astype(jnp.float32)
    b2_f = b2.astype(jnp.float32)
    b3_f = b3.astype(jnp.float32)

    if tile_b is None:
        tile_b = _select_tile_b(B, _tensorcores_per_chip())
    tile_b = min(tile_b, B)
    grid_steps = pl.cdiv(B, tile_b)
    b_pad = grid_steps * tile_b                         # lane-dense output slab width

    # Advisory cost estimate for XLA's scheduler.
    w_item = jnp.dtype(compute_dtype).itemsize
    flops = 2 * B * (F * H1 + H1 * H2 + H2 * O)
    bytes_accessed = (
        B * F * 4                                       # stream x (f32)
        + b_pad * 4                                     # write output slab (f32)
        + F * H1 * w_item + H1 * 4
        + H1 * H2 * w_item + H2 * 4
        + H2 * w_item + 4)
    cost = pl.CostEstimate(flops=flops, transcendentals=0,
                           bytes_accessed=bytes_accessed)

    # Grid-invariant blocks (constant block index -> fetched once, kept resident).
    def full(shape):
        return pl.BlockSpec(shape, lambda i: (0, 0))

    out_slab = pl.pallas_call(
        mlp_kernel,
        out_shape=jax.ShapeDtypeStruct((1, b_pad), jnp.float32),
        grid_spec=pltpu.PrefetchScalarGridSpec(
            num_scalar_prefetch=0,
            grid=(grid_steps,),
            in_specs=[
                pl.BlockSpec((tile_b, F), lambda i: (i, 0)),   # x: batch-tiled
                full((F, H1)), full((1, H1)),
                full((H1, H2)), full((1, H2)),
                full((1, H2)), full((1, 1)),
            ],
            out_specs=pl.BlockSpec((1, tile_b), lambda i: (0, i)),
        ),
        compiler_params=pltpu.CompilerParams(
            dimension_semantics=("parallel",),
        ),
        cost_estimate=cost,
    )(x.astype(jnp.float32), w1_c, b1_f, w2_c, b2_f, w3_row, b3_f)

    # Un-pad the lane-dense slab back to (B, 1): touches only B*4 bytes.
    return out_slab[0, :B].reshape(B, O)


def init_params(key, in_features):
    """Deterministic synthetic init matching nn.Linear shapes:
    fc1: (in_features -> 64), fc2: (64 -> 32), fc3: (32 -> 1)."""
    ks = jax.random.split(key, 6)

    def lin(kw, kb, fan_in, fan_out):
        bound = 1.0 / jnp.sqrt(fan_in)
        # stored as (in, out) so the kernel computes x @ W + b
        w = jax.random.uniform(kw, (fan_in, fan_out), jnp.float32, -bound, bound)
        b = jax.random.uniform(kb, (1, fan_out), jnp.float32, -bound, bound)
        return w, b

    w1, b1 = lin(ks[0], ks[1], in_features, 64)
    w2, b2 = lin(ks[2], ks[3], 64, 32)
    w3, b3 = lin(ks[4], ks[5], 32, 1)
    return (w1, b1, w2, b2, w3, b3)


def reference_forward_mixed(x, params, compute_dtype=jnp.bfloat16):
    """Pure-JAX reference mirroring the kernel's compute dtypes exactly."""
    w1, b1, w2, b2, w3, b3 = params
    h1 = jnp.dot(x.astype(compute_dtype), w1.astype(compute_dtype),
                 preferred_element_type=jnp.float32)
    h1 = jnp.maximum(h1 + b1, 0.0)
    h2 = jnp.dot(h1.astype(compute_dtype), w2.astype(compute_dtype),
                 preferred_element_type=jnp.float32)
    h2 = jnp.maximum(h2 + b2, 0.0)
    w3_row = jnp.transpose(w3).astype(compute_dtype)
    out_row = jax.lax.dot_general(
        w3_row, h2.astype(compute_dtype),
        dimension_numbers=(((1,), (1,)), ((), ())),
        preferred_element_type=jnp.float32)
    return jnp.transpose(out_row) + b3


def reference_forward_f32(x, params):
    """Full-precision reference (loose tolerance vs the bf16-MXU kernel)."""
    w1, b1, w2, b2, w3, b3 = params
    h1 = jnp.maximum(x @ w1 + b1, 0.0)
    h2 = jnp.maximum(h1 @ w2 + b2, 0.0)
    return h2 @ w3 + b3


if __name__ == "__main__":
    key = jax.random.PRNGKey(0)
    kx, kp, kx2 = jax.random.split(key, 3)

    batch, features = 8, 16          # X_train.shape[1] -> 16 synthetic features
    x = jax.random.normal(kx, (batch, features), dtype=jnp.float32)
    params = init_params(kp, features)

    out = jax.block_until_ready(net_forward(x, params))
    assert out.shape == (batch, 1)
    ref_mixed = reference_forward_mixed(x, params)
    ref_f32 = reference_forward_f32(x, params)
    assert jnp.allclose(out, ref_mixed, atol=2e-3, rtol=2e-3), "mismatch vs bf16 reference"
    assert jnp.allclose(out, ref_f32, atol=5e-2, rtol=5e-2), "mismatch vs f32 reference"

    # Larger ragged batch with a forced multi-step "parallel" grid: exercises
    # the lane-dense output slab, a partial final x block, and wrapper un-pad.
    batch2 = 1000
    x2 = jax.random.normal(kx2, (batch2, features), dtype=jnp.float32)
    out2 = jax.block_until_ready(net_forward(x2, params, tile_b=256))
    ref2 = reference_forward_mixed(x2, params)
    assert out2.shape == (batch2, 1)
    assert jnp.allclose(out2, ref2, atol=2e-3, rtol=2e-3), "mismatch (B=1000, tile_b=256)"

    # Default per-generation tile selection path on the same data.
    out3 = jax.block_until_ready(net_forward(x2, params))
    assert jnp.allclose(out3, ref2, atol=2e-3, rtol=2e-3), "mismatch (B=1000, auto tile)"

    print("KERNEL_OK")
</pallas_src>

<mosaic_0001>
module attributes {stable_mosaic.version = 11 : i64} {
  func.func @mlp_kernel(%arg0: i32, %arg1: memref<8x16xf32, #tpu.memory_space<vmem>>, %arg2: memref<16x64xbf16, #tpu.memory_space<vmem>>, %arg3: memref<1x64xf32, #tpu.memory_space<vmem>>, %arg4: memref<64x32xbf16, #tpu.memory_space<vmem>>, %arg5: memref<1x32xf32, #tpu.memory_space<vmem>>, %arg6: memref<1x32xbf16, #tpu.memory_space<vmem>>, %arg7: memref<1x1xf32, #tpu.memory_space<vmem>>, %arg8: memref<1x8xf32, #tpu.memory_space<vmem>>) attributes {dimension_semantics = [#tpu.dimension_semantics<parallel>], iteration_bounds = array<i64: 1>, scalar_prefetch = 0 : i64, scratch_operands = 0 : i64, tpu.core_type = #tpu.core_type<tc>, window_params = [{transform_indices = @transform_0, window_bounds = array<i64: 8, 16>}, {pipeline_mode = #tpu.pipeline_mode<synchronous>, transform_indices = @transform_1, window_bounds = array<i64: 16, 64>}, {pipeline_mode = #tpu.pipeline_mode<synchronous>, transform_indices = @transform_2, window_bounds = array<i64: 1, 64>}, {pipeline_mode = #tpu.pipeline_mode<synchronous>, transform_indices = @transform_3, window_bounds = array<i64: 64, 32>}, {pipeline_mode = #tpu.pipeline_mode<synchronous>, transform_indices = @transform_4, window_bounds = array<i64: 1, 32>}, {pipeline_mode = #tpu.pipeline_mode<synchronous>, transform_indices = @transform_5, window_bounds = array<i64: 1, 32>}, {pipeline_mode = #tpu.pipeline_mode<synchronous>, transform_indices = @transform_6, window_bounds = array<i64: 1, 1>}, {transform_indices = @transform_7, window_bounds = array<i64: 1, 8>}]} {
    %c0 = arith.constant 0 : index
    %c0_0 = arith.constant 0 : index
    %0 = vector.load %arg3[%c0, %c0_0] : memref<1x64xf32, #tpu.memory_space<vmem>>, vector<1x64xf32>
    %c0_1 = arith.constant 0 : index
    %c0_2 = arith.constant 0 : index
    %1 = vector.load %arg5[%c0_1, %c0_2] : memref<1x32xf32, #tpu.memory_space<vmem>>, vector<1x32xf32>
    %c0_3 = arith.constant 0 : index
    %c0_4 = arith.constant 0 : index
    %2 = vector.load %arg6[%c0_3, %c0_4] : memref<1x32xbf16, #tpu.memory_space<vmem>>, vector<1x32xbf16>
    %c0_5 = arith.constant 0 : index
    %c0_6 = arith.constant 0 : index
    %3 = vector.load %arg7[%c0_5, %c0_6] : memref<1x1xf32, #tpu.memory_space<vmem>>, vector<1x1xf32>
    %c0_7 = arith.constant 0 : index
    %c0_8 = arith.constant 0 : index
    %4 = vector.load %arg1[%c0_7, %c0_8] : memref<8x16xf32, #tpu.memory_space<vmem>>, vector<8x16xf32>
    %5 = arith.truncf %4 : vector<8x16xf32> to vector<8x16xbf16>
    %c0_9 = arith.constant 0 : index
    %c0_10 = arith.constant 0 : index
    %6 = vector.load %arg2[%c0_9, %c0_10] : memref<16x64xbf16, #tpu.memory_space<vmem>>, vector<16x64xbf16>
    %cst = arith.constant dense<0.000000e+00> : vector<8x64xf32>
    %7 = tpu.matmul %5, %6, %cst {dimension_numbers = #tpu.dot_dimension_numbers<[1], [0], [0], [1], [0, 0, 1, 1], [], []>} : vector<8x16xbf16>, vector<16x64xbf16>, vector<8x64xf32> -> vector<8x64xf32>
    %8 = vector.broadcast %0 : vector<1x64xf32> to vector<8x64xf32>
    %9 = arith.addf %7, %8 : vector<8x64xf32>
    %cst_11 = arith.constant 0.000000e+00 : f32
    %10 = vector.broadcast %cst_11 : f32 to vector<8x64xf32>
    %11 = arith.maximumf %9, %10 : vector<8x64xf32>
    %12 = arith.truncf %11 : vector<8x64xf32> to vector<8x64xbf16>
    %c0_12 = arith.constant 0 : index
    %c0_13 = arith.constant 0 : index
    %13 = vector.load %arg4[%c0_12, %c0_13] : memref<64x32xbf16, #tpu.memory_space<vmem>>, vector<64x32xbf16>
    %cst_14 = arith.constant dense<0.000000e+00> : vector<8x32xf32>
    %14 = tpu.matmul %12, %13, %cst_14 {dimension_numbers = #tpu.dot_dimension_numbers<[1], [0], [0], [1], [0, 0, 1, 1], [], []>} : vector<8x64xbf16>, vector<64x32xbf16>, vector<8x32xf32> -> vector<8x32xf32>
    %15 = vector.broadcast %1 : vector<1x32xf32> to vector<8x32xf32>
    %16 = arith.addf %14, %15 : vector<8x32xf32>
    %cst_15 = arith.constant 0.000000e+00 : f32
    %17 = vector.broadcast %cst_15 : f32 to vector<8x32xf32>
    %18 = arith.maximumf %16, %17 : vector<8x32xf32>
    %19 = arith.truncf %18 : vector<8x32xf32> to vector<8x32xbf16>
    %cst_16 = arith.constant dense<0.000000e+00> : vector<1x8xf32>
    %20 = tpu.matmul %2, %19, %cst_16 {dimension_numbers = #tpu.dot_dimension_numbers<[1], [1], [0], [0], [0, 0, 1, 0], [], []>} : vector<1x32xbf16>, vector<8x32xbf16>, vector<1x8xf32> -> vector<1x8xf32>
    %21 = vector.broadcast %3 : vector<1x1xf32> to vector<1x8xf32>
    %22 = arith.addf %20, %21 : vector<1x8xf32>
    %c0_17 = arith.constant 0 : index
    %c0_18 = arith.constant 0 : index
    %23 = vector.load %arg8[%c0_17, %c0_18] : memref<1x8xf32, #tpu.memory_space<vmem>>, vector<1x8xf32>
    tpu.vector_store %arg8[%c0_17, %c0_18], %22 {strides = array<i32>} : memref<1x8xf32, #tpu.memory_space<vmem>>, vector<1x8xf32>,
    return
  }
  func.func @transform_0(%arg0: i32) -> (i32, i32) {
    %c0_i32 = arith.constant 0 : i32
    %c0_i32_0 = arith.constant 0 : i32
    return %arg0, %c0_i32 : i32, i32
  }
  func.func @transform_1(%arg0: i32) -> (i32, i32) {
    %c0_i32 = arith.constant 0 : i32
    %c0_i32_0 = arith.constant 0 : i32
    %c0_i32_1 = arith.constant 0 : i32
    return %c0_i32, %c0_i32_0 : i32, i32
  }
  func.func @transform_2(%arg0: i32) -> (i32, i32) {
    %c0_i32 = arith.constant 0 : i32
    %c0_i32_0 = arith.constant 0 : i32
    %c0_i32_1 = arith.constant 0 : i32
    return %c0_i32, %c0_i32_0 : i32, i32
  }
  func.func @transform_3(%arg0: i32) -> (i32, i32) {
    %c0_i32 = arith.constant 0 : i32
    %c0_i32_0 = arith.constant 0 : i32
    %c0_i32_1 = arith.constant 0 : i32
    return %c0_i32, %c0_i32_0 : i32, i32
  }
  func.func @transform_4(%arg0: i32) -> (i32, i32) {
    %c0_i32 = arith.constant 0 : i32
    %c0_i32_0 = arith.constant 0 : i32
    %c0_i32_1 = arith.constant 0 : i32
    return %c0_i32, %c0_i32_0 : i32, i32
  }
  func.func @transform_5(%arg0: i32) -> (i32, i32) {
    %c0_i32 = arith.constant 0 : i32
    %c0_i32_0 = arith.constant 0 : i32
    %c0_i32_1 = arith.constant 0 : i32
    return %c0_i32, %c0_i32_0 : i32, i32
  }
  func.func @transform_6(%arg0: i32) -> (i32, i32) {
    %c0_i32 = arith.constant 0 : i32
    %c0_i32_0 = arith.constant 0 : i32
    %c0_i32_1 = arith.constant 0 : i32
    return %c0_i32, %c0_i32_0 : i32, i32
  }
  func.func @transform_7(%arg0: i32) -> (i32, i32) {
    %c0_i32 = arith.constant 0 : i32
    %c0_i32_0 = arith.constant 0 : i32
    return %c0_i32, %arg0 : i32, i32
  }
}

</mosaic_0001>

<llo_original>
// kernel: tpu_custom_call.1
$region0: #{tpu_custom_call.1}
  #allocation0 [shape = 'u32[]', space=smem, size = 0x4, offset = 0x4, fixed_abs, tag = 'smem constant byte address 0x4 - core index']
  #allocation1 [shape = 'u32[72,128]{1,0:T(1,128)}', space=vmem, size = 0x9000, scoped, tag = 'internal scratch']
  #allocation2 [shape = 'f32[1,1]{1,0:T(1,128)S(1)}', space=vmem, size = 0x200, scoped, tag = 'scoped memory for tpu_custom_call.1']
  %s0 = inlined_call_operand.vmem [shape: f32[8,16], index: 0, kind: input, shape index: {}]
  %s1 = inlined_call_operand.vmem [shape: bf16[16,64], index: 1, kind: input, shape index: {}]
  %s2 = inlined_call_operand.vmem [shape: f32[1,64], index: 2, kind: input, shape index: {}]
  %s3 = inlined_call_operand.vmem [shape: bf16[64,32], index: 3, kind: input, shape index: {}]
  %s4 = inlined_call_operand.vmem [shape: f32[1,32], index: 4, kind: input, shape index: {}]
  %s5 = inlined_call_operand.vmem [shape: bf16[1,32], index: 5, kind: input, shape index: {}]
  %s6 = inlined_call_operand.<no memory space> [shape: f32[1,1], index: 6, kind: input, shape index: {}]
  %s7 = inlined_call_operand.hbm [shape: f32[1,8], index: 7, kind: output, shape index: {}]
  %s8 = sld [smem:[#allocation0]]
  $region38: #{tpu_custom_call.1} parent=0
    _
  %s10 = ssub.s32 1, %s8
  %s11 = scalar_select 0, %s10, %s8
  %v12 = vstv %s6
  %13 = vst [vmem:[#allocation2] sm:$0x1] %v12
  $region1: #{tpu_custom_call.1} parent=0
    #allocation3 [shape = 'u8[512]{0}', space=vmem, size = 0x400, scoped, tag = 'output window, operand 0, single buffered']
    #allocation4 [shape = 's32[1]{0}', space=sflag, size = 0x4, scoped, tag = 'scoped memory for tpu_custom_call.1']
    %14 = vsyncpa [#allocation4], 0
    // Predicated region
    $region2: #{tpu_custom_call.1} parent=1 // pred_check
      _
    $region3: #{tpu_custom_call.1} parent=1 // pred_check_branch
      %16 = sbr.rel (0) target = $region5
    $region4: #{tpu_custom_call.1} parent=1 // pred_region
      _
    $region5: #{tpu_custom_call.1} parent=1 // pred_fallthru
      _
    // Predicated region
    $region6: #{tpu_custom_call.1} parent=1 // pred_check
      _
    $region7: #{tpu_custom_call.1} parent=1 // pred_check_branch
      %18 = sbr.rel (0) target = $region9
    $region8: #{tpu_custom_call.1} parent=1 // pred_region
      _
    $region9: #{tpu_custom_call.1} parent=1 // pred_fallthru
      _
    // Predicated region
    $region10: #{tpu_custom_call.1} parent=1 // pred_check
      _
    $region11: #{tpu_custom_call.1} parent=1 // pred_check_branch
      %20 = sbr.rel (0) target = $region13
    $region12: #{tpu_custom_call.1} parent=1 // pred_region
      _
    $region13: #{tpu_custom_call.1} parent=1 // pred_fallthru
      _
    // Predicated region
    $region14: #{tpu_custom_call.1} parent=1 // pred_check
      _
    $region15: #{tpu_custom_call.1} parent=1 // pred_check_branch
      %22 = sbr.rel (0) target = $region17
    $region16: #{tpu_custom_call.1} parent=1 // pred_region
      _
    $region17: #{tpu_custom_call.1} parent=1 // pred_fallthru
      _
    // Predicated region
    $region18: #{tpu_custom_call.1} parent=1 // pred_check
      _
    $region19: #{tpu_custom_call.1} parent=1 // pred_check_branch
      %24 = sbr.rel (0) target = $region21
    $region20: #{tpu_custom_call.1} parent=1 // pred_region
      _
    $region21: #{tpu_custom_call.1} parent=1 // pred_fallthru
      _
    // Predicated region
    $region22: #{tpu_custom_call.1} parent=1 // pred_check
      _
    $region23: #{tpu_custom_call.1} parent=1 // pred_check_branch
      %26 = sbr.rel (0) target = $region25
    $region24: #{tpu_custom_call.1} parent=1 // pred_region
      _
    $region25: #{tpu_custom_call.1} parent=1 // pred_fallthru
      _
    // Predicated region
    $region26: #{tpu_custom_call.1} parent=1 // pred_check
      _
    $region27: #{tpu_custom_call.1} parent=1 // pred_check_branch
      %28 = sbr.rel (0) target = $region29
    $region28: #{tpu_custom_call.1} parent=1 // pred_region
      _
    $region29: #{tpu_custom_call.1} parent=1 // pred_fallthru
      _
    %v30 = vld [vmem:[%s2] sm:$0x1]
    %v31 = vld [vmem:[%s4] sm:$0x1]
    %v32 = vld [vmem:[%s5] sm:$0x1]
    %v33 = vld [vmem:[#allocation2] sm:$0x1]
    %v34 = vld [vmem:[%s0] sm:$0xff]
    %v35 = vpack.c.bf16 %v34, %v34
    %v36 = vld [vmem:[%s1] sm:$0xf]
    %v37 = vld [vmem:[%s1 + $0x4] sm:$0xf]
    %v39 = vperm.slane %v30, 0
    %v43 = vunpack.c.l.b16 %v36
    %v44 = vunpack.c.l.b16 %v37
    %v45 = vpack.c.b16 %v44, %v43
    %vm47 = vcmask 130048
    %v49 = vsel %vm47, %v35, 0
    %51 = vmatpush.bf16.msra.mxu0 0
    %52 = vmatpush.bf16.msra.mxu0 0
    %53 = vmatpush.bf16.msra.mxu0 0
    %54 = vmatpush.bf16.msra.mxu0 0
    %55 = vmatpush.bf16.msra.mxu0 0
    %56 = vmatpush.bf16.msra.mxu0 0
    %57 = vmatpush.bf16.msra.mxu0 0
    %58 = vmatpush.bf16.msra.mxu0 %v45
    %59 = vmatmul.bf16.gmra.mxu0 %v49
    %v60 = vpop.f32.mrf.mxu0
    %v61 = vadd.f32 %v39, %v60
    %v62 = vpop.f32.mrf.mxu0
    %63 = vdwg.mxu0
    %v64 = vmax.f32 %v61, 0.0
    %v65 = vpack.c.bf16 %v64, %v64
    %v66 = vld [vmem:[%s3] sm:$0xf]
    %v67 = vld [vmem:[%s3 + $0x4] sm:$0xf]
    %v68 = vld [vmem:[%s3 + $0x8] sm:$0xf]
    %v69 = vld [vmem:[%s3 + $0xc] sm:$0xf]
    %v70 = vld [vmem:[%s3 + $0x10] sm:$0xf]
    %v71 = vld [vmem:[%s3 + $0x14] sm:$0xf]
    %v72 = vld [vmem:[%s3 + $0x18] sm:$0xf]
    %v73 = vld [vmem:[%s3 + $0x1c] sm:$0xf]
    %v75 = vperm.slane %v31, 0
    %v85 = vunpack.c.l.b16 %v66
    %v86 = vunpack.c.l.b16 %v67
    %v87 = vunpack.c.l.b16 %v68
    %v88 = vunpack.c.l.b16 %v69
    %v89 = vunpack.c.l.b16 %v70
    %v90 = vunpack.c.l.b16 %v71
    %v91 = vunpack.c.l.b16 %v72
    %v92 = vunpack.c.l.b16 %v73
    %v93 = vpack.c.b16 %v86, %v85
    %v94 = vpack.c.b16 %v88, %v87
    %v95 = vpack.c.b16 %v90, %v89
    %v96 = vpack.c.b16 %v92, %v91
    %vm101 = vcmask 523264
    %v103 = vsel %vm101, %v65, 0
    %105 = vmatpush.bf16.msra.mxu0 0
    %106 = vmatpush.bf16.msra.mxu0 0
    %107 = vmatpush.bf16.msra.mxu0 0
    %108 = vmatpush.bf16.msra.mxu0 0
    %109 = vmatpush.bf16.msra.mxu0 %v96
    %110 = vmatpush.bf16.msra.mxu0 %v95
    %111 = vmatpush.bf16.msra.mxu0 %v94
    %112 = vmatpush.bf16.msra.mxu0 %v93
    %113 = vmatmul.bf16.gmra.mxu0 %v103
    %v114 = vpop.f32.mrf.mxu0
    %v115 = vadd.f32 %v75, %v114
    %v116 = vpop.f32.mrf.mxu0
    %117 = vdwg.mxu0
    %v118 = vmax.f32 %v115, 0.0
    %v119 = vpack.c.bf16 %v118, %v118
    %121 = vset.pattern.permute.xlu0 0
    %122 = vperm.xlu0 %121, %v33
    %v123 = vpop.permute.xlu0 %122
    %v125 = vperm.slane %v123, 0
    %vm126 = vcmask 261120
    %v128 = vsel %vm126, %v32, 0
    %v131 = vsel %vm126, %v119, 0
    %133 = vmatpush.bf16.xpose.msra.mxu0 0
    %134 = vmatpush.bf16.xpose.msra.mxu0 0
    %135 = vmatpush.bf16.xpose.msra.mxu0 0
    %136 = vmatpush.bf16.xpose.msra.mxu0 0
    %137 = vmatpush.bf16.xpose.msra.mxu0 0
    %138 = vmatpush.bf16.xpose.msra.mxu0 0
    %139 = vmatpush.bf16.xpose.msra.mxu0 0
    %140 = vmatpush.bf16.xpose.msra.mxu0 %v131
    %141 = vmatmul.bf16.gmra.mxu0 %v128
    %v142 = vpop.f32.mrf.mxu0
    %v143 = vadd.f32 %v125, %v142
    %v144 = vpop.f32.mrf.mxu0
    %145 = vdwg.mxu0
    %vm146 = vcmask 57344
    %147 = vst.msk [vmem:[#allocation3] sm:$0x1] %vm146, %v143
    // Predicated region
    $region30: #{tpu_custom_call.1} parent=1 // pred_check
      _
    $region31: #{tpu_custom_call.1} parent=1 // pred_check_branch
      %149 = sbr.rel (0) target = $region33
    $region32: #{tpu_custom_call.1} parent=1 // pred_region
      %151 = vsyncadd [#allocation4], 0
      %s153 = sshll.u32 [#allocation3], 4
      %s154 = int_to_ptr.vmem [resolvable:$true] %s153
      %s155 = sshll.u32 %s7, 4
      %s156 = int_to_ptr.hbm [resolvable:$true] %s155
      %158 = dma.vmem_to_hbm [thread:$0]  %s154, 16, %s156, [#allocation4]
    $region33: #{tpu_custom_call.1} parent=1 // pred_fallthru
      _
    // Predicated region
    $region34: #{tpu_custom_call.1} parent=1 // pred_check
      _
    $region35: #{tpu_custom_call.1} parent=1 // pred_check_branch
      %160 = sbr.rel (0) target = $region37
    $region36: #{tpu_custom_call.1} parent=1 // pred_region
      %162 = dma.done [#allocation4], 16
    $region37: #{tpu_custom_call.1} parent=1 // pred_fallthru
      _
    %163 = vsyncpa [#allocation4], 1

</llo_original>
